<compile_context>
chip_gen: v7x
topology: tpu7x:2x2x1
jax: 0.10.0
libtpu: 0.0.40
codegen_flags: <defaults>
</compile_context>

<pallas_src>
import math

import jax
import jax.numpy as jnp
from jax.experimental import pallas as pl
from jax.experimental.pallas import tpu as pltpu


# ---------------------------------------------------------------------------
# Kernels
# ---------------------------------------------------------------------------

def _centering_kernel(x_ref, o_ref):
    """Fallback path: reduce over the (possibly lane-sparse) last dim."""
    x = x_ref[...].astype(jnp.float32)
    mean = jnp.mean(x, axis=-1, keepdims=True)
    o_ref[...] = (x - mean).astype(o_ref.dtype)


def _make_packed_kernel(feat, split_f32):
    """Lane-dense path: the block's last dim packs k rows of `feat` features.

    a_ref holds the (W, W) 0/1 block-diagonal group-sum matrix (exact in
    bf16); the per-row mean is gsum / feat.  The matmul rides the otherwise
    idle MXU slot (the kernel is HBM-bound).
    """
    inv_feat = 1.0 / float(feat)

    def kernel(x_ref, a_ref, o_ref):
        x = x_ref[...]
        a = a_ref[...]
        if split_f32:
            # bf16 hi/lo split: accurate to ~2^-18 relative even though the
            # MXU operands are bf16; accumulation is f32.
            x_hi = x.astype(jnp.bfloat16)
            x_lo = (x - x_hi.astype(jnp.float32)).astype(jnp.bfloat16)
            gsum = (jnp.dot(x_hi, a, preferred_element_type=jnp.float32)
                    + jnp.dot(x_lo, a, preferred_element_type=jnp.float32))
            o_ref[...] = (x - gsum * inv_feat).astype(o_ref.dtype)
        else:
            # bf16 input: keep the subtraction in bf16 (halves vreg pressure);
            # the row sum still accumulates in f32 on the MXU.
            gsum = jnp.dot(x, a, preferred_element_type=jnp.float32)
            mean = (gsum * inv_feat).astype(x.dtype)
            o_ref[...] = (x - mean).astype(o_ref.dtype)

    return kernel


# ---------------------------------------------------------------------------
# Tiling helpers
# ---------------------------------------------------------------------------

def _round_up(n, m):
    return -(-n // m) * m


def _sublane_multiple(itemsize):
    # Native packed sublane tile: 8 rows (f32), 16 (bf16), 32 (int8/fp8).
    return max(8, 32 // max(1, int(itemsize)))


def _vmem_capacity_bytes():
    """Per-generation VMEM capacity (128 MiB v5e/v6e, 64 MiB v7x)."""
    try:
        cap = getattr(pltpu.get_tpu_info(), "vmem_capacity_bytes", None)
        if cap:
            return int(cap)
    except Exception:
        pass
    return 64 << 20  # conservative (v7x-sized) fallback


def _packing_factor(rows, feat, dtype):
    """Rows packed per lane-row so the block's last dim is a multiple of 128."""
    if feat % 128 == 0 or dtype not in (jnp.float32, jnp.bfloat16):
        return 1
    k = 128 // math.gcd(feat, 128)
    width = k * feat                      # = lcm(feat, 128)
    if k < 2 or width > 256 or rows % k != 0:
        return 1
    return k


def _choose_row_tile(rows, width, itemsize, budget_bytes, min_steps=8):
    """Largest sublane-aligned row tile whose double-buffered in+out blocks fit
    `budget_bytes`, capped so the grid has >= `min_steps` steps when the row
    count allows (keeps both TensorCores pipelined on dual-core parts)."""
    sub = _sublane_multiple(itemsize)
    per_row = 4 * width * itemsize        # (in + out) x double buffering
    if rows <= 4 * sub and rows * per_row <= budget_bytes:
        return rows                       # tiny problem: one full block
    tile_budget = max(sub, (budget_bytes // per_row) // sub * sub)
    tile_steps = max(sub, _round_up(-(-rows // min_steps), sub))
    return max(sub, min(tile_budget, tile_steps, _round_up(rows, sub)))


# ---------------------------------------------------------------------------
# Wrapper
# ---------------------------------------------------------------------------

def centering_pallas(x):
    """Pallas centering: x - mean(x, axis=-1, keepdims=True)."""
    feat = x.shape[-1]
    if x.size == 0:
        return x
    rows = x.size // feat
    itemsize = x.dtype.itemsize

    cap = _vmem_capacity_bytes()
    budget = min(40 << 20, (cap * 3) // 8)            # block budget
    vmem_limit = int(min(64 << 20, (cap * 3) // 4))   # compiler VMEM limit
    params = pltpu.CompilerParams(dimension_semantics=("parallel",),
                                  vmem_limit_bytes=vmem_limit)

    k = _packing_factor(rows, feat, x.dtype)
    if k > 1:
        # ----- lane-dense packed path -----
        width = k * feat
        rows_p = rows // k
        x2 = x.reshape(rows_p, width)
        # 0/1 block-diagonal group-sum matrix (entries exact in bf16).
        gsum_mat = jnp.kron(jnp.eye(k, dtype=jnp.float32),
                            jnp.ones((feat, feat), dtype=jnp.float32)
                            ).astype(jnp.bfloat16)
        split_f32 = x.dtype == jnp.float32
        tile = _choose_row_tile(rows_p, width, itemsize, budget)
        grid = (pl.cdiv(rows_p, tile),)
        x_spec = pl.BlockSpec((tile, width), lambda i: (i, 0))
        a_spec = pl.BlockSpec((width, width), lambda i: (0, 0))  # resident
        n_mm = 2 if split_f32 else 1
        cost = pl.CostEstimate(
            flops=2 * n_mm * rows_p * width * width + 2 * rows_p * width,
            transcendentals=0,
            bytes_accessed=2 * rows * feat * itemsize + width * width * 2,
        )
        out2 = pl.pallas_call(
            _make_packed_kernel(feat, split_f32),
            out_shape=jax.ShapeDtypeStruct((rows_p, width), x.dtype),
            grid=grid,
            in_specs=[x_spec, a_spec],
            out_specs=x_spec,
            compiler_params=params,
            cost_estimate=cost,
        )(x2, gsum_mat)
        return out2.reshape(x.shape)

    # ----- fallback: feat already a multiple of 128 (lane-dense as-is), or
    # rows not divisible by the packing factor, or exotic dtype -----
    x2 = x.reshape(rows, feat)
    tile = _choose_row_tile(rows, feat, itemsize, budget)
    grid = (pl.cdiv(rows, tile),)
    spec = pl.BlockSpec((tile, feat), lambda i: (i, 0))
    cost = pl.CostEstimate(flops=2 * rows * feat, transcendentals=0,
                           bytes_accessed=2 * rows * feat * itemsize)
    out2 = pl.pallas_call(
        _centering_kernel,
        out_shape=jax.ShapeDtypeStruct((rows, feat), x.dtype),
        grid=grid,
        in_specs=[spec],
        out_specs=spec,
        compiler_params=params,
        cost_estimate=cost,
    )(x2)
    return out2.reshape(x.shape)


def centering_ref(x):
    """Pure-JAX reference matching the PyTorch forward."""
    xf = x.astype(jnp.float32)
    mean = jnp.mean(xf, axis=-1, keepdims=True)
    return (xf - mean).astype(x.dtype)


if __name__ == "__main__":
    key = jax.random.PRNGKey(0)
    k1, k2, k3, k4, k5 = jax.random.split(key, 5)

    # Primary case: feat=16 -> packed lane-dense path (k=8, width=128).
    x = jax.random.normal(k1, (2, 4, 16, 16), dtype=jnp.float32)
    out = centering_pallas(x)
    jax.block_until_ready(out)
    assert jnp.allclose(out, centering_ref(x), atol=1e-5, rtol=1e-5)

    # Packed path with a multi-step grid and a partial last row-block
    # (rows_p = 33 over 8-row tiles); padded rows never feed real rows.
    x_multi = jax.random.normal(k2, (4, 66, 16), dtype=jnp.float32)
    out_multi = centering_pallas(x_multi)
    jax.block_until_ready(out_multi)
    assert jnp.allclose(out_multi, centering_ref(x_multi), atol=1e-5, rtol=1e-5)

    # Fallback path: rows (15) not divisible by the packing factor.
    x_odd = jax.random.normal(k3, (3, 5, 16), dtype=jnp.float32)
    out_odd = centering_pallas(x_odd)
    jax.block_until_ready(out_odd)
    assert jnp.allclose(out_odd, centering_ref(x_odd), atol=1e-5, rtol=1e-5)

    # Already lane-dense feature dim (feat % 128 == 0): plain reduce path.
    x_dense = jax.random.normal(k4, (2, 8, 128), dtype=jnp.float32)
    out_dense = centering_pallas(x_dense)
    jax.block_until_ready(out_dense)
    assert jnp.allclose(out_dense, centering_ref(x_dense), atol=1e-5, rtol=1e-5)

    # bf16: packed path, bf16 on the wire + bf16 subtract, f32 row-sum on MXU.
    x_bf16 = jax.random.normal(k5, (2, 4, 16, 16), dtype=jnp.bfloat16)
    out_bf16 = centering_pallas(x_bf16)
    jax.block_until_ready(out_bf16)
    assert jnp.allclose(out_bf16.astype(jnp.float32),
                        centering_ref(x_bf16).astype(jnp.float32),
                        atol=1e-2, rtol=1e-2)

    print("KERNEL_OK")
</pallas_src>

<mosaic_0001>
module attributes {stable_mosaic.version = 11 : i64} {
  func.func @kernel(%arg0: i32, %arg1: memref<16x128xf32, #tpu.memory_space<vmem>>, %arg2: memref<128x128xbf16, #tpu.memory_space<vmem>>, %arg3: memref<16x128xf32, #tpu.memory_space<vmem>>) attributes {dimension_semantics = [#tpu.dimension_semantics<parallel>], iteration_bounds = array<i64: 1>, scalar_prefetch = 0 : i64, scratch_operands = 0 : i64, tpu.core_type = #tpu.core_type<tc>, window_params = [{transform_indices = @transform_0, window_bounds = array<i64: 16, 128>}, {pipeline_mode = #tpu.pipeline_mode<synchronous>, transform_indices = @transform_1, window_bounds = array<i64: 128, 128>}, {transform_indices = @transform_2, window_bounds = array<i64: 16, 128>}]} {
    %c0 = arith.constant 0 : index
    %c0_0 = arith.constant 0 : index
    %0 = vector.load %arg1[%c0, %c0_0] : memref<16x128xf32, #tpu.memory_space<vmem>>, vector<16x128xf32>
    %c0_1 = arith.constant 0 : index
    %c0_2 = arith.constant 0 : index
    %1 = vector.load %arg2[%c0_1, %c0_2] : memref<128x128xbf16, #tpu.memory_space<vmem>>, vector<128x128xbf16>
    %2 = arith.truncf %0 : vector<16x128xf32> to vector<16x128xbf16>
    %3 = arith.extf %2 : vector<16x128xbf16> to vector<16x128xf32>
    %4 = arith.subf %0, %3 : vector<16x128xf32>
    %5 = arith.truncf %4 : vector<16x128xf32> to vector<16x128xbf16>
    %cst = arith.constant dense<0.000000e+00> : vector<16x128xf32>
    %6 = tpu.matmul %2, %1, %cst {dimension_numbers = #tpu.dot_dimension_numbers<[1], [0], [0], [1], [0, 0, 1, 1], [], []>} : vector<16x128xbf16>, vector<128x128xbf16>, vector<16x128xf32> -> vector<16x128xf32>
    %cst_3 = arith.constant dense<0.000000e+00> : vector<16x128xf32>
    %7 = tpu.matmul %5, %1, %cst_3 {dimension_numbers = #tpu.dot_dimension_numbers<[1], [0], [0], [1], [0, 0, 1, 1], [], []>} : vector<16x128xbf16>, vector<128x128xbf16>, vector<16x128xf32> -> vector<16x128xf32>
    %8 = arith.addf %6, %7 : vector<16x128xf32>
    %cst_4 = arith.constant 6.250000e-02 : f32
    %9 = vector.broadcast %cst_4 : f32 to vector<16x128xf32>
    %10 = arith.mulf %8, %9 : vector<16x128xf32>
    %11 = arith.subf %0, %10 : vector<16x128xf32>
    %c0_5 = arith.constant 0 : index
    %c0_6 = arith.constant 0 : index
    %12 = vector.load %arg3[%c0_5, %c0_6] : memref<16x128xf32, #tpu.memory_space<vmem>>, vector<16x128xf32>
    tpu.vector_store %arg3[%c0_5, %c0_6], %11 {strides = array<i32>} : memref<16x128xf32, #tpu.memory_space<vmem>>, vector<16x128xf32>,
    return
  }
  func.func @transform_0(%arg0: i32) -> (i32, i32) {
    %c0_i32 = arith.constant 0 : i32
    %c0_i32_0 = arith.constant 0 : i32
    return %arg0, %c0_i32 : i32, i32
  }
  func.func @transform_1(%arg0: i32) -> (i32, i32) {
    %c0_i32 = arith.constant 0 : i32
    %c0_i32_0 = arith.constant 0 : i32
    %c0_i32_1 = arith.constant 0 : i32
    return %c0_i32, %c0_i32_0 : i32, i32
  }
  func.func @transform_2(%arg0: i32) -> (i32, i32) {
    %c0_i32 = arith.constant 0 : i32
    %c0_i32_0 = arith.constant 0 : i32
    return %arg0, %c0_i32 : i32, i32
  }
}

</mosaic_0001>

<llo_original>
// kernel: tpu_custom_call.1
$region0: #{tpu_custom_call.1}
  #allocation0 [shape = 'u32[]', space=smem, size = 0x4, offset = 0x4, fixed_abs, tag = 'smem constant byte address 0x4 - core index']
  #allocation1 [shape = 'u32[144,128]{1,0:T(1,128)}', space=vmem, size = 0x12000, scoped, tag = 'internal scratch']
  %s0 = inlined_call_operand.hbm [shape: f32[16,128], index: 0, kind: input, shape index: {}]
  %s1 = inlined_call_operand.hbm [shape: bf16[128,128], index: 1, kind: input, shape index: {}]
  %s2 = inlined_call_operand.hbm [shape: f32[16,128], index: 2, kind: output, shape index: {}]
  %s3 = sld [smem:[#allocation0]]
  $region26: #{tpu_custom_call.1} parent=0
    _
  %s5 = ssub.s32 1, %s3
  %s6 = scalar_select 0, %s5, %s3
  $region1: #{tpu_custom_call.1} parent=0
    #allocation2 [shape = 'u8[8192]{0}', space=vmem, size = 0x2000, scoped, tag = 'input window, operand 0, single buffered']
    #allocation3 [shape = 's32[1]{0}', space=sflag, size = 0x4, scoped, tag = 'scoped memory for tpu_custom_call.1']
    #allocation4 [shape = 's32[1]{0}', space=sflag, size = 0x4, scoped, tag = 'scoped memory for tpu_custom_call.1']
    #allocation5 [shape = 'u8[32768]{0}', space=vmem, size = 0x8000, scoped, tag = 'input window, operand 1, single buffered']
    #allocation6 [shape = 's32[1]{0}', space=sflag, size = 0x4, scoped, tag = 'scoped memory for tpu_custom_call.1']
    #allocation7 [shape = 'u8[8192]{0}', space=vmem, size = 0x2000, scoped, tag = 'output window, operand 0, single buffered']
    %7 = vsyncpa [#allocation3], 0
    %8 = vsyncpa [#allocation6], 0
    %9 = vsyncpa [#allocation4], 0
    // Predicated region
    $region2: #{tpu_custom_call.1} parent=1 // pred_check
      _
    $region3: #{tpu_custom_call.1} parent=1 // pred_check_branch
      %11 = sbr.rel (0) target = $region5
    $region4: #{tpu_custom_call.1} parent=1 // pred_region
      %s13 = ssub.s32 256, 256
      %14 = vsyncadd [#allocation3], %s13
      %s15 = sshll.u32 [#allocation2], 4
      %s16 = int_to_ptr.vmem [resolvable:$true] %s15
      %21 = dma.hbm_to_vmem [thread:$0]  %s0, 256, %s16, [#allocation3], 128, 128, 8
    $region5: #{tpu_custom_call.1} parent=1 // pred_fallthru
      _
    // Predicated region
    $region6: #{tpu_custom_call.1} parent=1 // pred_check
      _
    $region7: #{tpu_custom_call.1} parent=1 // pred_check_branch
      %23 = sbr.rel (0) target = $region9
    $region8: #{tpu_custom_call.1} parent=1 // pred_region
      %s25 = ssub.s32 1024, 1024
      %26 = vsyncadd [#allocation6], %s25
      %s27 = sshll.u32 [#allocation5], 4
      %s28 = int_to_ptr.vmem [resolvable:$true] %s27
      %33 = dma.hbm_to_vmem [thread:$0]  %s1, 1024, %s28, [#allocation6], 64, 64, 4
    $region9: #{tpu_custom_call.1} parent=1 // pred_fallthru
      _
    // Predicated region
    $region10: #{tpu_custom_call.1} parent=1 // pred_check
      _
    $region11: #{tpu_custom_call.1} parent=1 // pred_check_branch
      %35 = sbr.rel (0) target = $region13
    $region12: #{tpu_custom_call.1} parent=1 // pred_region
      %36 = dma.done [#allocation3], 256
    $region13: #{tpu_custom_call.1} parent=1 // pred_fallthru
      _
    // Predicated region
    $region14: #{tpu_custom_call.1} parent=1 // pred_check
      _
    $region15: #{tpu_custom_call.1} parent=1 // pred_check_branch
      %38 = sbr.rel (0) target = $region17
    $region16: #{tpu_custom_call.1} parent=1 // pred_region
      %39 = dma.done [#allocation6], 1024
    $region17: #{tpu_custom_call.1} parent=1 // pred_fallthru
      _
    %v41 = vld [vmem:[#allocation2] sm:$0xff]
    %v42 = vld [vmem:[#allocation2 + $0x8] sm:$0xff]
    %v43 = vld [vmem:[#allocation5] sm:$0xf]
    %v44 = vld [vmem:[#allocation5 + $0x4] sm:$0xf]
    %v45 = vld [vmem:[#allocation5 + $0x8] sm:$0xf]
    %v46 = vld [vmem:[#allocation5 + $0xc] sm:$0xf]
    %v47 = vld [vmem:[#allocation5 + $0x10] sm:$0xf]
    %v48 = vld [vmem:[#allocation5 + $0x14] sm:$0xf]
    %v49 = vld [vmem:[#allocation5 + $0x18] sm:$0xf]
    %v50 = vld [vmem:[#allocation5 + $0x1c] sm:$0xf]
    %v51 = vld [vmem:[#allocation5 + $0x20] sm:$0xf]
    %v52 = vld [vmem:[#allocation5 + $0x24] sm:$0xf]
    %v53 = vld [vmem:[#allocation5 + $0x28] sm:$0xf]
    %v54 = vld [vmem:[#allocation5 + $0x2c] sm:$0xf]
    %v55 = vld [vmem:[#allocation5 + $0x30] sm:$0xf]
    %v56 = vld [vmem:[#allocation5 + $0x34] sm:$0xf]
    %v57 = vld [vmem:[#allocation5 + $0x38] sm:$0xf]
    %v58 = vld [vmem:[#allocation5 + $0x3c] sm:$0xf]
    %v59 = vpack.c.bf16 %v42, %v41
    %v60 = vunpack.c.l.bf16 %v59
    %v61 = vunpack.c.h.bf16 %v59
    %v62 = vsub.f32 %v41, %v60
    %v63 = vsub.f32 %v42, %v61
    %v64 = vpack.c.bf16 %v63, %v62
    %v81 = vunpack.c.l.b16 %v43
    %v82 = vunpack.c.l.b16 %v44
    %v83 = vunpack.c.l.b16 %v45
    %v84 = vunpack.c.l.b16 %v46
    %v85 = vunpack.c.l.b16 %v47
    %v86 = vunpack.c.l.b16 %v48
    %v87 = vunpack.c.l.b16 %v49
    %v88 = vunpack.c.l.b16 %v50
    %v89 = vunpack.c.l.b16 %v51
    %v90 = vunpack.c.l.b16 %v52
    %v91 = vunpack.c.l.b16 %v53
    %v92 = vunpack.c.l.b16 %v54
    %v93 = vunpack.c.l.b16 %v55
    %v94 = vunpack.c.l.b16 %v56
    %v95 = vunpack.c.l.b16 %v57
    %v96 = vunpack.c.l.b16 %v58
    %v97 = vpack.c.b16 %v82, %v81
    %v98 = vpack.c.b16 %v84, %v83
    %v99 = vpack.c.b16 %v86, %v85
    %v100 = vpack.c.b16 %v88, %v87
    %v101 = vpack.c.b16 %v90, %v89
    %v102 = vpack.c.b16 %v92, %v91
    %v103 = vpack.c.b16 %v94, %v93
    %v104 = vpack.c.b16 %v96, %v95
    %113 = vmatprep.subr.bf16.mxu0 0
    %114 = vmatpush1.bf16.msra.mxu0 %v97
    %115 = vmatprep.subr.bf16.mxu0 0
    %116 = vmatpush1.bf16.msra.mxu0 %v98
    %117 = vmatprep.subr.bf16.mxu0 0
    %118 = vmatpush1.bf16.msra.mxu0 %v99
    %119 = vmatprep.subr.bf16.mxu0 0
    %120 = vmatpush1.bf16.msra.mxu0 %v100
    %121 = vmatprep.subr.bf16.mxu0 0
    %122 = vmatpush1.bf16.msra.mxu0 %v101
    %123 = vmatprep.subr.bf16.mxu0 0
    %124 = vmatpush1.bf16.msra.mxu0 %v102
    %125 = vmatprep.subr.bf16.mxu0 0
    %126 = vmatpush1.bf16.msra.mxu0 %v103
    %127 = vmatprep.subr.bf16.mxu0 0
    %128 = vmatpush1.bf16.msra.mxu0 %v104
    %129 = vmatprep.subr.bf16.mxu0 0
    %130 = vmatpush1.bf16.msra.mxu0 0
    %131 = vmatprep.subr.bf16.mxu0 0
    %132 = vmatpush1.bf16.msra.mxu0 0
    %133 = vmatprep.subr.bf16.mxu0 0
    %134 = vmatpush1.bf16.msra.mxu0 0
    %135 = vmatprep.subr.bf16.mxu0 0
    %136 = vmatpush1.bf16.msra.mxu0 0
    %137 = vmatprep.subr.bf16.mxu0 0
    %138 = vmatpush1.bf16.msra.mxu0 0
    %139 = vmatprep.subr.bf16.mxu0 0
    %140 = vmatpush1.bf16.msra.mxu0 0
    %141 = vmatprep.subr.bf16.mxu0 0
    %142 = vmatpush1.bf16.msra.mxu0 0
    %143 = vmatprep.subr.bf16.mxu0 0
    %144 = vmatpush1.bf16.msra.mxu0 0
    %145 = vmatprep.mubr.bf16.mxu0 0
    %146 = vmatmul.mubr.bf16.gmra.mrb[0].mxu0 %v64
    %v147 = vpop.f32.mrb[0].mxu0
    %v148 = vadd.f32 0.0, %v147
    %v149 = vpop.f32.mrb[0].mxu0
    %v150 = vpop.f32.mrb[0].mxu0
    %v151 = vadd.f32 0.0, %v150
    %v152 = vpop.f32.mrb[0].mxu0
    %153 = vdwg.mxu0
    %154 = vmatprep.subr.bf16.mxu0 0
    %155 = vmatpush1.bf16.msra.mxu0 %v97
    %156 = vmatprep.subr.bf16.mxu0 0
    %157 = vmatpush1.bf16.msra.mxu0 %v98
    %158 = vmatprep.subr.bf16.mxu0 0
    %159 = vmatpush1.bf16.msra.mxu0 %v99
    %160 = vmatprep.subr.bf16.mxu0 0
    %161 = vmatpush1.bf16.msra.mxu0 %v100
    %162 = vmatprep.subr.bf16.mxu0 0
    %163 = vmatpush1.bf16.msra.mxu0 %v101
    %164 = vmatprep.subr.bf16.mxu0 0
    %165 = vmatpush1.bf16.msra.mxu0 %v102
    %166 = vmatprep.subr.bf16.mxu0 0
    %167 = vmatpush1.bf16.msra.mxu0 %v103
    %168 = vmatprep.subr.bf16.mxu0 0
    %169 = vmatpush1.bf16.msra.mxu0 %v104
    %170 = vmatprep.subr.bf16.mxu0 0
    %171 = vmatpush1.bf16.msra.mxu0 0
    %172 = vmatprep.subr.bf16.mxu0 0
    %173 = vmatpush1.bf16.msra.mxu0 0
    %174 = vmatprep.subr.bf16.mxu0 0
    %175 = vmatpush1.bf16.msra.mxu0 0
    %176 = vmatprep.subr.bf16.mxu0 0
    %177 = vmatpush1.bf16.msra.mxu0 0
    %178 = vmatprep.subr.bf16.mxu0 0
    %179 = vmatpush1.bf16.msra.mxu0 0
    %180 = vmatprep.subr.bf16.mxu0 0
    %181 = vmatpush1.bf16.msra.mxu0 0
    %182 = vmatprep.subr.bf16.mxu0 0
    %183 = vmatpush1.bf16.msra.mxu0 0
    %184 = vmatprep.subr.bf16.mxu0 0
    %185 = vmatpush1.bf16.msra.mxu0 0
    %186 = vmatprep.mubr.bf16.mxu0 0
    %187 = vmatmul.mubr.bf16.gmra.mrb[0].mxu0 %v59
    %v188 = vpop.f32.mrb[0].mxu0
    %v189 = vadd.f32 %v148, %v188
    %v190 = vpop.f32.mrb[0].mxu0
    %v191 = vpop.f32.mrb[0].mxu0
    %v192 = vadd.f32 %v151, %v191
    %v193 = vpop.f32.mrb[0].mxu0
    %194 = vdwg.mxu0
    %v195 = vmul.f32 %v189, 0.0625
    %v196 = vmul.f32 %v192, 0.0625
    %v197 = vsub.f32 %v41, %v195
    %v198 = vsub.f32 %v42, %v196
    %199 = vst [vmem:[#allocation7] sm:$0xff] %v197
    %200 = vst [vmem:[#allocation7 + $0x8] sm:$0xff] %v198
    // Predicated region
    $region18: #{tpu_custom_call.1} parent=1 // pred_check
      _
    $region19: #{tpu_custom_call.1} parent=1 // pred_check_branch
      %202 = sbr.rel (0) target = $region21
    $region20: #{tpu_custom_call.1} parent=1 // pred_region
      %s204 = ssub.s32 256, 256
      %205 = vsyncadd [#allocation4], %s204
      %s206 = sshll.u32 [#allocation7], 4
      %s207 = int_to_ptr.vmem [resolvable:$true] %s206
      %212 = dma.vmem_to_hbm [thread:$0]  %s207, 256, %s2, [#allocation4], 128, 128, 8
    $region21: #{tpu_custom_call.1} parent=1 // pred_fallthru
      _
    // Predicated region
    $region22: #{tpu_custom_call.1} parent=1 // pred_check
      _
    $region23: #{tpu_custom_call.1} parent=1 // pred_check_branch
      %214 = sbr.rel (0) target = $region25
    $region24: #{tpu_custom_call.1} parent=1 // pred_region
      %215 = dma.done [#allocation4], 256
    $region25: #{tpu_custom_call.1} parent=1 // pred_fallthru
      _
    %216 = vsyncpa [#allocation3], 1
    %217 = vsyncpa [#allocation6], 1
    %218 = vsyncpa [#allocation4], 1

</llo_original>
